<compile_context>
chip_gen: v5e
topology: v5e:2x2
jax: 0.10.0
libtpu: 0.0.40
codegen_flags: <defaults>
</compile_context>

<pallas_src>
import jax
import jax.numpy as jnp
from jax.experimental import pallas as pl
from jax.experimental.pallas import tpu as pltpu

_LANES = 128      # vreg lane width (last dim)
_SUBLANES = 8     # vreg sublane count (second-to-last dim)
_MAX_BLOCK_ROWS = 512   # 512 x 128 x 4B = 256 KiB per f32 block -> well inside
                        # v7x's 64 MiB VMEM even with in+out double-buffered.


def _relu_kernel(x_ref, o_ref):
    # Elementwise ReLU on the VPU; immediate 0.0 avoids materializing zeros.
    o_ref[...] = jnp.maximum(x_ref[...], 0.0)


def _relu_pallas(v):
    """Elementwise relu of a 1-D vector via a lane-dense tiled Pallas kernel."""
    n = v.shape[0]

    # Number of 128-wide rows needed, rounded up to a multiple of 8 sublanes.
    rows_raw = pl.cdiv(n, _LANES)
    rows_min = pl.cdiv(rows_raw, _SUBLANES) * _SUBLANES

    # Block rows: multiple of 8, capped so each block stays a modest VMEM tile.
    block_rows = min(_MAX_BLOCK_ROWS, rows_min)

    # Pad row count so the grid divides evenly.
    rows = pl.cdiv(rows_min, block_rows) * block_rows
    padded = rows * _LANES

    v_p = jnp.pad(v, (0, padded - n)) if padded != n else v
    v2 = v_p.reshape(rows, _LANES)

    grid = (rows // block_rows,)
    out2 = pl.pallas_call(
        _relu_kernel,
        out_shape=jax.ShapeDtypeStruct((rows, _LANES), v.dtype),
        grid=grid,
        in_specs=[pl.BlockSpec((block_rows, _LANES), lambda i: (i, 0))],
        out_specs=pl.BlockSpec((block_rows, _LANES), lambda i: (i, 0)),
        compiler_params=pltpu.CompilerParams(
            dimension_semantics=("parallel",)),
    )(v2)

    return out2.reshape(padded)[:n]


def prior_network_forward(x, mean, logvar):
    """Pallas equivalent of PriorNetwork.forward.

    Args:
      x:      any array (unused, kept to mirror the PyTorch signature).
      mean:   (input_dim,) parameter.
      logvar: (input_dim,) parameter.

    Returns:
      (mean, relu(logvar)), each of shape (input_dim,).
    """
    del x  # forward does not depend on x (same as the PyTorch module)
    # `mean` is an identity: return it directly, no kernel copy / HBM traffic.
    return mean, _relu_pallas(logvar)


if __name__ == "__main__":
    input_dim = 128
    batch = 2

    key = jax.random.PRNGKey(0)
    k_mean, k_logvar, k_x = jax.random.split(key, 3)

    # nn.Parameter(torch.zeros(input_dim)) would make ReLU trivial (all zeros);
    # use deterministic random values of the same shape/dtype to exercise the
    # ReLU path. Semantics of forward are unchanged.
    mean_param = jax.random.normal(k_mean, (input_dim,), dtype=jnp.float32)
    logvar_param = jax.random.normal(k_logvar, (input_dim,), dtype=jnp.float32)

    # Example input x (unused by forward, as in the PyTorch module).
    x = jax.random.normal(k_x, (batch, input_dim), dtype=jnp.float32)

    out_mean, out_logvar = prior_network_forward(x, mean_param, logvar_param)
    jax.block_until_ready(out_mean)
    jax.block_until_ready(out_logvar)

    # Reference check against plain JAX semantics of the PyTorch forward.
    ref_mean = mean_param
    ref_logvar = jnp.maximum(logvar_param, 0.0)
    assert out_mean.shape == (input_dim,)
    assert out_logvar.shape == (input_dim,)
    assert jnp.allclose(out_mean, ref_mean)
    assert jnp.allclose(out_logvar, ref_logvar)

    print("KERNEL_OK")
</pallas_src>

<mosaic_0001>
module attributes {stable_mosaic.version = 11 : i64} {
  func.func @_relu_kernel(%arg0: i32, %arg1: memref<8x128xf32, #tpu.memory_space<vmem>>, %arg2: memref<8x128xf32, #tpu.memory_space<vmem>>) attributes {dimension_semantics = [#tpu.dimension_semantics<parallel>], iteration_bounds = array<i64: 1>, scalar_prefetch = 0 : i64, scratch_operands = 0 : i64, tpu.core_type = #tpu.core_type<tc>, window_params = [{transform_indices = @transform_0, window_bounds = array<i64: 8, 128>}, {transform_indices = @transform_1, window_bounds = array<i64: 8, 128>}]} {
    %c0 = arith.constant 0 : index
    %c0_0 = arith.constant 0 : index
    %0 = vector.load %arg1[%c0, %c0_0] : memref<8x128xf32, #tpu.memory_space<vmem>>, vector<8x128xf32>
    %cst = arith.constant 0.000000e+00 : f32
    %1 = vector.broadcast %cst : f32 to vector<8x128xf32>
    %2 = arith.maximumf %0, %1 : vector<8x128xf32>
    %c0_1 = arith.constant 0 : index
    %c0_2 = arith.constant 0 : index
    %3 = vector.load %arg2[%c0_1, %c0_2] : memref<8x128xf32, #tpu.memory_space<vmem>>, vector<8x128xf32>
    tpu.vector_store %arg2[%c0_1, %c0_2], %2 {strides = array<i32>} : memref<8x128xf32, #tpu.memory_space<vmem>>, vector<8x128xf32>,
    return
  }
  func.func @transform_0(%arg0: i32) -> (i32, i32) {
    %c0_i32 = arith.constant 0 : i32
    %c0_i32_0 = arith.constant 0 : i32
    return %arg0, %c0_i32 : i32, i32
  }
  func.func @transform_1(%arg0: i32) -> (i32, i32) {
    %c0_i32 = arith.constant 0 : i32
    %c0_i32_0 = arith.constant 0 : i32
    return %arg0, %c0_i32 : i32, i32
  }
}

</mosaic_0001>

<llo_original>
// kernel: tpu_custom_call.1
$region0: #{tpu_custom_call.1}
  #allocation0 [shape = 'u32[]', space=smem, size = 0x4, offset = 0x4, fixed_abs, tag = 'smem constant byte address 0x4 - core index']
  #allocation1 [shape = 'u32[72,128]{1,0:T(1,128)}', space=vmem, size = 0x9000, scoped, tag = 'internal scratch']
  %s0 = inlined_call_operand.hbm [shape: f32[8,128], index: 0, kind: input, shape index: {}]
  %s1 = inlined_call_operand.hbm [shape: f32[8,128], index: 1, kind: output, shape index: {}]
  %s2 = sld [smem:[#allocation0]]
  $region18: #{tpu_custom_call.1} parent=0
    _
  %s4 = ssub.s32 1, %s2
  %s5 = scalar_select 0, %s4, %s2
  $region1: #{tpu_custom_call.1} parent=0
    #allocation2 [shape = 'u8[4096]{0}', space=vmem, size = 0x1000, scoped, tag = 'input window, operand 0, single buffered']
    #allocation3 [shape = 's32[1]{0}', space=sflag, size = 0x4, scoped, tag = 'scoped memory for tpu_custom_call.1']
    #allocation4 [shape = 's32[1]{0}', space=sflag, size = 0x4, scoped, tag = 'scoped memory for tpu_custom_call.1']
    #allocation5 [shape = 'u8[4096]{0}', space=vmem, size = 0x1000, scoped, tag = 'output window, operand 0, single buffered']
    %6 = vsyncpa [#allocation3], 0
    %7 = vsyncpa [#allocation4], 0
    // Predicated region
    $region2: #{tpu_custom_call.1} parent=1 // pred_check
      _
    $region3: #{tpu_custom_call.1} parent=1 // pred_check_branch
      %9 = sbr.rel (0) target = $region5
    $region4: #{tpu_custom_call.1} parent=1 // pred_region
      %11 = vsyncadd [#allocation3], 0
      %s13 = sshll.u32 %s0, 4
      %s14 = int_to_ptr.hbm [resolvable:$true] %s13
      %s15 = sshll.u32 [#allocation2], 4
      %s16 = int_to_ptr.vmem [resolvable:$true] %s15
      %18 = dma.hbm_to_vmem [thread:$0]  %s14, 128, %s16, [#allocation3]
    $region5: #{tpu_custom_call.1} parent=1 // pred_fallthru
      _
    // Predicated region
    $region6: #{tpu_custom_call.1} parent=1 // pred_check
      _
    $region7: #{tpu_custom_call.1} parent=1 // pred_check_branch
      %20 = sbr.rel (0) target = $region9
    $region8: #{tpu_custom_call.1} parent=1 // pred_region
      %22 = dma.done [#allocation3], 128
    $region9: #{tpu_custom_call.1} parent=1 // pred_fallthru
      _
    %v23 = vld [vmem:[#allocation2] sm:$0xff]
    %v24 = vmax.f32 %v23, 0.0
    %25 = vst [vmem:[#allocation5] sm:$0xff] %v24
    // Predicated region
    $region10: #{tpu_custom_call.1} parent=1 // pred_check
      _
    $region11: #{tpu_custom_call.1} parent=1 // pred_check_branch
      %27 = sbr.rel (0) target = $region13
    $region12: #{tpu_custom_call.1} parent=1 // pred_region
      %29 = vsyncadd [#allocation4], 0
      %s31 = sshll.u32 [#allocation5], 4
      %s32 = int_to_ptr.vmem [resolvable:$true] %s31
      %s33 = sshll.u32 %s1, 4
      %s34 = int_to_ptr.hbm [resolvable:$true] %s33
      %36 = dma.vmem_to_hbm [thread:$0]  %s32, 128, %s34, [#allocation4]
    $region13: #{tpu_custom_call.1} parent=1 // pred_fallthru
      _
    // Predicated region
    $region14: #{tpu_custom_call.1} parent=1 // pred_check
      _
    $region15: #{tpu_custom_call.1} parent=1 // pred_check_branch
      %38 = sbr.rel (0) target = $region17
    $region16: #{tpu_custom_call.1} parent=1 // pred_region
      %40 = dma.done [#allocation4], 128
    $region17: #{tpu_custom_call.1} parent=1 // pred_fallthru
      _
    %41 = vsyncpa [#allocation3], 1
    %42 = vsyncpa [#allocation4], 1

</llo_original>
